<compile_context>
chip_gen: v5e
topology: v5e:2x2
jax: 0.10.0
libtpu: 0.0.40
codegen_flags: <defaults>
</compile_context>

<pallas_src>
import functools

import jax
import jax.numpy as jnp
from jax.experimental import pallas as pl
from jax.experimental.pallas import tpu as pltpu

_NEG_PAD = -1.0e30  # finite "minus infinity" used to pad the mask row (keeps 0*pad finite)


def _round_up(x, m):
    return -(-x // m) * m


def _pool_kernel(S, TS, feat_ref, mask_ref, of_ref, om_ref,
                 m_scr, l_scr, accf_scr, accm_scr):
    """Online-softmax(mask)-weighted spatial pooling of feature (+ mask) channels."""
    s = pl.program_id(1)
    n_s = pl.num_programs(1)

    @pl.when(s == 0)
    def _():
        m_scr[...] = jnp.full(m_scr.shape, -jnp.inf, m_scr.dtype)
        l_scr[...] = jnp.zeros(l_scr.shape, l_scr.dtype)
        accf_scr[...] = jnp.zeros(accf_scr.shape, accf_scr.dtype)
        accm_scr[...] = jnp.zeros(accm_scr.shape, accm_scr.dtype)

    # bf16 (or f32) ingest; all arithmetic / accumulation in f32 (v5e has no bf16 VPU).
    f = feat_ref[0].astype(jnp.float32)                         # (C, TS)

    if TS % 128 == 0:
        start = pl.multiple_of(s * TS, 128)
    else:
        start = s * TS                                          # single-tile case (TS == S)
    # Mask row is VMEM-resident for the whole batch element; slice the current tile.
    m = mask_ref[0, :, pl.ds(start, TS)].astype(jnp.float32)    # (1, TS)

    if S % TS != 0:
        # Only load-bearing on the final partial tile: out-of-range feature lanes may
        # hold non-finite garbage and 0 * inf = nan.  (The mask row itself is padded
        # wrapper-side with a large-negative *finite* value, so p == 0 there and the
        # weighted-mask sum stays finite without an extra where.)
        lane = jax.lax.broadcasted_iota(jnp.int32, (1, TS), 1)
        f = jnp.where(start + lane < S, f, 0.0)

    # Online softmax update (running max with rescaling of the accumulators).
    tile_max = jnp.max(m, axis=-1, keepdims=True)               # (1, 1)
    m_new = jnp.maximum(m_scr[...], tile_max)
    alpha = jnp.exp(m_scr[...] - m_new)                         # (1, 1)
    p = jnp.exp(m - m_new)                                      # (1, TS); exactly 0 at pad lanes

    l_scr[...] = alpha * l_scr[...] + jnp.sum(p, axis=-1, keepdims=True)

    if TS % 128 == 0:
        # Weighted feature reduce on the otherwise-idle MXU: f @ p^T -> (C, 1).
        wf = jax.lax.dot_general(f, p, (((1,), (1,)), ((), ())),
                                 preferred_element_type=jnp.float32)
    else:
        wf = jnp.sum(f * p, axis=-1, keepdims=True)
    accf_scr[...] = alpha * accf_scr[...] + wf
    accm_scr[...] = alpha * accm_scr[...] + jnp.sum(m * p, axis=-1, keepdims=True)
    m_scr[...] = m_new

    @pl.when(s == n_s - 1)
    def _():
        inv = 1.0 / l_scr[...]                                  # exact; once per batch element
        of_ref[0] = accf_scr[...] * inv                         # (C, 1)
        om_ref[0] = accm_scr[...] * inv                         # (1, 1)


def _tpu_vmem_info():
    """(double-buffered tile budget bytes, physical VMEM bytes or None) -- generation aware."""
    try:
        cap = int(pltpu.get_tpu_info().vmem_capacity_bytes)
    except Exception:                         # non-TPU / interpret fallback: stay conservative
        return 12 * 1024 * 1024, None
    if cap <= 64 * 1024 * 1024:               # v7x-class: only 64 MiB physical per TensorCore
        return 20 * 1024 * 1024, cap
    return 24 * 1024 * 1024, cap              # v5e / v6e: 128 MiB physical


def _choose_ts(C, S, feat_isz, mask_isz, budget_bytes, max_tile=None):
    """Spatial tile (lane) size: multiple of 128, budget-sized, divisor-of-S preferred."""
    # Resident mask row (double-buffered across the batch axis) + slack come out of the
    # budget first; the rest feeds the double-buffered feature tile.
    mask_resident = 2 * 8 * _round_up(S, 128) * mask_isz
    avail = budget_bytes - mask_resident - (256 << 10)
    per_lane = 2 * _round_up(C, 8) * feat_isz            # double-buffered feature, per lane
    ts_cap = max(avail // per_lane, 128)
    # Keep per-step DMA runs >= 512 lanes even for very large C (the explicit vmem_limit
    # below absorbs the overshoot; physical VMEM is 64-128 MiB).
    # TODO(synk): for C so large that 512 lanes cannot fit, split C over an extra grid
    # axis with partial accumulators instead of shrinking TS below 512.
    ts_cap = max(ts_cap, 512)
    if max_tile is not None:
        ts_cap = min(ts_cap, max_tile)
    if S <= ts_cap:
        return S                                          # whole spatial row in one tile
    ts_cap = max(128, (ts_cap // 128) * 128)
    # Prefer a 128-multiple that divides S exactly so the partial-tile masking path
    # compiles away; otherwise fall back to the largest tile under the cap.
    best_div = 0
    for t in range(128, ts_cap + 1, 128):
        if S % t == 0:
            best_div = t
    if best_div and (best_div >= 512 or best_div == ts_cap or ts_cap < 512):
        return best_div
    return ts_cap


def _vmem_limit(C, TS, S_pad, feat_isz, mask_isz, phys_cap):
    """Explicit scoped-VMEM limit from the actual footprint (+ headroom)."""
    feat_tile = _round_up(C, 8) * _round_up(TS, 128) * feat_isz
    mask_tile = 8 * _round_up(S_pad, 128) * mask_isz
    out_tiles = (_round_up(C, 8) + 8) * 128 * 4
    scratch = (3 * 8 + _round_up(C, 8)) * 128 * 4
    limit = 2 * (feat_tile + mask_tile + out_tiles) + scratch + (4 << 20)
    limit = max(limit, 16 << 20)
    if phys_cap is not None:
        limit = min(limit, int(phys_cap * 0.9))
    else:
        limit = min(limit, 48 << 20)
    return int(limit)


def _nearest_interp_3d(mask, size):
    # Plain-JAX glue equivalent of F.interpolate(mask, size=(D,H,W)) (default
    # mode='nearest'): in_idx = floor(out_idx * in_size / out_size).
    B, C, Din, Hin, Win = mask.shape
    D, H, W = size
    di = (jnp.arange(D) * Din) // D
    hi = (jnp.arange(H) * Hin) // H
    wi = (jnp.arange(W) * Win) // W
    return mask[:, :, di][:, :, :, hi][:, :, :, :, wi]


def init_params(key, channel):
    """Deterministic init matching the PyTorch module's parameter shapes."""
    c2 = channel // 2
    ks = jax.random.split(key, 6)

    def unif(k, shape, fan_in):
        bound = 1.0 / jnp.sqrt(jnp.float32(fan_in))
        return jax.random.uniform(k, shape, jnp.float32, -bound, bound)

    return dict(
        # project: Conv3d(channel+1, channel//2, kernel_size=1)
        wp=unif(ks[0], (c2, channel + 1), channel + 1),
        bp=unif(ks[1], (c2, 1), channel + 1),
        # auto_linear: MLP(channel//2, channel//2, 1, num_layers=2)
        w1=unif(ks[2], (c2, c2), c2),
        b1=unif(ks[3], (c2, 1), c2),
        w2=unif(ks[4], (1, c2), c2),
        b2=unif(ks[5], (1, 1), c2),
    )


def auto_thres_forward(feature, mask, params, *, max_tile=None, vmem_limit_bytes=None):
    """feature: (B, C, D, H, W) f32 or bf16 (NCDHW, like PyTorch); mask: (B, 1, d, h, w)."""
    B, C, D, H, W = feature.shape
    S = D * H * W

    mask_r = _nearest_interp_3d(mask, (D, H, W))
    feat = feature.reshape(B, C, S)          # keep producer dtype (bf16 welcome): upcast in-kernel
    mk = mask_r.reshape(B, 1, S)

    feat_isz = feat.dtype.itemsize
    mask_isz = mk.dtype.itemsize

    budget, phys_cap = _tpu_vmem_info()
    TS = _choose_ts(C, S, feat_isz, mask_isz, budget, max_tile)
    n_s = pl.cdiv(S, TS)
    S_pad = n_s * TS
    if S_pad != S:
        # Pad only the tiny mask row (1/C of the feature bytes) so the resident-row
        # slicing never goes out of range and softmax weights are exactly 0 there;
        # feature tiles are lane-masked in-kernel on the final partial step instead.
        mk = jnp.pad(mk, ((0, 0), (0, 0), (0, S_pad - S)), constant_values=_NEG_PAD)

    if vmem_limit_bytes is None:
        vmem_limit_bytes = _vmem_limit(C, TS, S_pad, feat_isz, mask_isz, phys_cap)

    kernel = functools.partial(_pool_kernel, S, TS)

    pooled_f, pooled_m = pl.pallas_call(
        kernel,
        out_shape=(jax.ShapeDtypeStruct((B, C, 1), jnp.float32),
                   jax.ShapeDtypeStruct((B, 1, 1), jnp.float32)),
        grid_spec=pltpu.PrefetchScalarGridSpec(
            num_scalar_prefetch=0,
            grid=(B, n_s),
            in_specs=[
                pl.BlockSpec((1, C, TS), lambda b, s: (b, 0, s)),      # feature S-tile (streamed)
                pl.BlockSpec((1, 1, S_pad), lambda b, s: (b, 0, 0)),   # mask row (resident per b)
            ],
            out_specs=(
                pl.BlockSpec((1, C, 1), lambda b, s: (b, 0, 0)),       # pooled feature channels
                pl.BlockSpec((1, 1, 1), lambda b, s: (b, 0, 0)),       # pooled mask channel
            ),
            scratch_shapes=[
                pltpu.VMEM((1, 1), jnp.float32),    # running max
                pltpu.VMEM((1, 1), jnp.float32),    # running sum of exp
                pltpu.VMEM((C, 1), jnp.float32),    # running weighted feature sums
                pltpu.VMEM((1, 1), jnp.float32),    # running weighted mask sum
            ],
        ),
        compiler_params=pltpu.CompilerParams(
            # TODO(synk): on v7x (2 TensorCores) with B == 1, split the S sweep over a
            # leading CORE_PARALLEL axis emitting per-core partial (m, l, accf, accm)
            # states and merge them with a logsumexp-style combine in the XLA epilogue.
            dimension_semantics=("parallel", "arbitrary"),
            vmem_limit_bytes=vmem_limit_bytes,
        ),
    )(feat, mk)

    # Tiny epilogue in plain XLA on the pooled (B, C+1) vector:
    #   f = Wp @ x_pool + bp   (exact, pool-before-project: sum(softmax) == 1)
    #   thres = sigmoid(W2 @ relu(W1 @ f + b1) + b2)
    pooled = jnp.concatenate([pooled_f[:, :, 0], pooled_m[:, :, 0]], axis=1)   # (B, C+1)
    fproj = pooled @ params["wp"].T + params["bp"][:, 0]
    h = jnp.maximum(fproj @ params["w1"].T + params["b1"][:, 0], 0.0)
    logit = h @ params["w2"].T + params["b2"][:, 0]
    return jax.nn.sigmoid(logit)                                               # (B, 1)


def auto_thres_reference(feature, mask, params):
    """Pure-JAX reference of the same semantics (for verification)."""
    feature = feature.astype(jnp.float32)
    mask = mask.astype(jnp.float32)
    B, C, D, H, W = feature.shape
    S = D * H * W
    mask_r = _nearest_interp_3d(mask, (D, H, W))
    x = jnp.concatenate([feature, mask_r], axis=1)                   # (B, C+1, D, H, W)
    proj = jnp.einsum("oc,bcdhw->bodhw", params["wp"], x) + params["bp"].reshape(1, -1, 1, 1, 1)
    proj = proj.reshape(B, C // 2, S)
    sm = jax.nn.softmax(mask_r.reshape(B, 1, S), axis=-1)
    f = jnp.sum(proj * sm, axis=-1)                                  # (B, C//2)
    h = jnp.maximum(f @ params["w1"].T + params["b1"][:, 0], 0.0)
    logit = h @ params["w2"].T + params["b2"][:, 0]
    return jax.nn.sigmoid(logit)                                     # (B, 1)


if __name__ == "__main__":
    channel = 4
    B = 2

    key = jax.random.PRNGKey(0)
    kf, km, kp = jax.random.split(key, 3)
    params = init_params(kp, channel)
    mask = jax.random.normal(km, (B, 1, 2, 4, 4), jnp.float32)       # resized to (D,H,W) inside

    # 1) f32 feature, divisible multi-tile online-softmax path: S = 4*8*8 = 256, TS=128 -> grid (B, 2).
    feat1 = jax.random.normal(kf, (B, channel, 4, 8, 8), jnp.float32)
    out1 = jax.block_until_ready(auto_thres_forward(feat1, mask, params, max_tile=128))
    ref1 = auto_thres_reference(feat1, mask, params)
    assert out1.shape == (B, 1)
    assert jnp.allclose(out1, ref1, atol=2e-5, rtol=2e-5), (out1, ref1)

    # 2) f32 feature, non-divisible S (= 4*8*9 = 288) exercising the masked final partial tile.
    feat2 = jax.random.normal(kf, (B, channel, 4, 8, 9), jnp.float32)
    out2 = jax.block_until_ready(auto_thres_forward(feat2, mask, params, max_tile=128))
    ref2 = auto_thres_reference(feat2, mask, params)
    assert jnp.allclose(out2, ref2, atol=2e-5, rtol=2e-5), (out2, ref2)

    # 3) bf16 feature from an (emulated) upstream bf16 producer; auto tile size
    #    (single resident tile here) + in-kernel f32 upcast, f32 accumulation.
    feat3 = jax.random.normal(kf, (B, channel, 4, 8, 8), jnp.float32).astype(jnp.bfloat16)
    out3 = jax.block_until_ready(auto_thres_forward(feat3, mask, params))
    ref3 = auto_thres_reference(feat3, mask, params)
    assert jnp.allclose(out3, ref3, atol=5e-5, rtol=5e-5), (out3, ref3)

    print("KERNEL_OK")
</pallas_src>

<mosaic_0001>
module attributes {stable_mosaic.version = 11 : i64} {
  func.func @_pool_kernel(%arg0: i32, %arg1: i32, %arg2: memref<1x4x128xf32, #tpu.memory_space<vmem>>, %arg3: memref<1x1x256xf32, #tpu.memory_space<vmem>>, %arg4: memref<1x4x1xf32, #tpu.memory_space<vmem>>, %arg5: memref<1x1x1xf32, #tpu.memory_space<vmem>>, %arg6: memref<1x1xf32, #tpu.memory_space<vmem>>, %arg7: memref<1x1xf32, #tpu.memory_space<vmem>>, %arg8: memref<4x1xf32, #tpu.memory_space<vmem>>, %arg9: memref<1x1xf32, #tpu.memory_space<vmem>>) attributes {dimension_semantics = [#tpu.dimension_semantics<parallel>, #tpu.dimension_semantics<arbitrary>], iteration_bounds = array<i64: 2, 2>, scalar_prefetch = 0 : i64, scratch_operands = 4 : i64, tpu.core_type = #tpu.core_type<tc>, window_params = [{transform_indices = @transform_0, window_bounds = array<i64: 1, 4, 128>}, {transform_indices = @transform_1, window_bounds = array<i64: 1, 1, 256>}, {transform_indices = @transform_2, window_bounds = array<i64: 1, 4, 1>}, {transform_indices = @transform_3, window_bounds = array<i64: 1, 1, 1>}]} {
    %c0_i32 = arith.constant 0 : i32
    %0 = arith.cmpi eq, %arg1, %c0_i32 : i32
    %1 = arith.extui %0 : i1 to i32
    %c0_i32_0 = arith.constant 0 : i32
    %2 = arith.cmpi ne, %1, %c0_i32_0 : i32
    scf.if %2 {
      %cst_27 = arith.constant 0xFF800000 : f32
      %43 = vector.broadcast %cst_27 : f32 to vector<1x1xf32>
      %c0_28 = arith.constant 0 : index
      %c0_29 = arith.constant 0 : index
      %44 = vector.load %arg6[%c0_28, %c0_29] : memref<1x1xf32, #tpu.memory_space<vmem>>, vector<1x1xf32>
      tpu.vector_store %arg6[%c0_28, %c0_29], %43 {strides = array<i32>} : memref<1x1xf32, #tpu.memory_space<vmem>>, vector<1x1xf32>,
      %cst_30 = arith.constant 0.000000e+00 : f32
      %45 = vector.broadcast %cst_30 : f32 to vector<1x1xf32>
      %c0_31 = arith.constant 0 : index
      %c0_32 = arith.constant 0 : index
      %46 = vector.load %arg7[%c0_31, %c0_32] : memref<1x1xf32, #tpu.memory_space<vmem>>, vector<1x1xf32>
      tpu.vector_store %arg7[%c0_31, %c0_32], %45 {strides = array<i32>} : memref<1x1xf32, #tpu.memory_space<vmem>>, vector<1x1xf32>,
      %cst_33 = arith.constant 0.000000e+00 : f32
      %47 = vector.broadcast %cst_33 : f32 to vector<4x1xf32>
      %c0_34 = arith.constant 0 : index
      %c0_35 = arith.constant 0 : index
      %48 = vector.load %arg8[%c0_34, %c0_35] : memref<4x1xf32, #tpu.memory_space<vmem>>, vector<4x1xf32>
      tpu.vector_store %arg8[%c0_34, %c0_35], %47 {strides = array<i32>} : memref<4x1xf32, #tpu.memory_space<vmem>>, vector<4x1xf32>,
      %cst_36 = arith.constant 0.000000e+00 : f32
      %49 = vector.broadcast %cst_36 : f32 to vector<1x1xf32>
      %c0_37 = arith.constant 0 : index
      %c0_38 = arith.constant 0 : index
      %50 = vector.load %arg9[%c0_37, %c0_38] : memref<1x1xf32, #tpu.memory_space<vmem>>, vector<1x1xf32>
      tpu.vector_store %arg9[%c0_37, %c0_38], %49 {strides = array<i32>} : memref<1x1xf32, #tpu.memory_space<vmem>>, vector<1x1xf32>,
    } else {
    }
    %c0 = arith.constant 0 : index
    %c0_1 = arith.constant 0 : index
    %c0_2 = arith.constant 0 : index
    %3 = vector.load %arg2[%c0, %c0_1, %c0_2] : memref<1x4x128xf32, #tpu.memory_space<vmem>>, vector<1x4x128xf32>
    %4 = vector.shape_cast %3 : vector<1x4x128xf32> to vector<4x128xf32>
    %c128_i32 = arith.constant 128 : i32
    %5 = arith.muli %arg1, %c128_i32 : i32
    %6 = tpu.assume_multiple %5, 128 : i32
    %c0_3 = arith.constant 0 : index
    %c0_4 = arith.constant 0 : index
    %7 = arith.index_cast %6 : i32 to index
    %8 = vector.load %arg3[%c0_3, %c0_4, %7] : memref<1x1x256xf32, #tpu.memory_space<vmem>>, vector<1x1x128xf32>
    %9 = vector.shape_cast %8 : vector<1x1x128xf32> to vector<1x128xf32>
    %cst = arith.constant dense<0xFF800000> : vector<1xf32>
    %10 = vector.multi_reduction <maximumf>, %9, %cst [1] : vector<1x128xf32> to vector<1xf32>
    %11 = vector.shape_cast %10 : vector<1xf32> to vector<1x1xf32>
    %c0_5 = arith.constant 0 : index
    %c0_6 = arith.constant 0 : index
    %12 = vector.load %arg6[%c0_5, %c0_6] : memref<1x1xf32, #tpu.memory_space<vmem>>, vector<1x1xf32>
    %13 = arith.maximumf %12, %11 : vector<1x1xf32>
    %c0_7 = arith.constant 0 : index
    %c0_8 = arith.constant 0 : index
    %14 = vector.load %arg6[%c0_7, %c0_8] : memref<1x1xf32, #tpu.memory_space<vmem>>, vector<1x1xf32>
    %15 = arith.subf %14, %13 : vector<1x1xf32>
    %16 = math.exp %15 : vector<1x1xf32>
    %17 = vector.broadcast %13 : vector<1x1xf32> to vector<1x128xf32>
    %18 = arith.subf %9, %17 : vector<1x128xf32>
    %19 = math.exp %18 : vector<1x128xf32>
    %c0_9 = arith.constant 0 : index
    %c0_10 = arith.constant 0 : index
    %20 = vector.load %arg7[%c0_9, %c0_10] : memref<1x1xf32, #tpu.memory_space<vmem>>, vector<1x1xf32>
    %21 = arith.mulf %16, %20 : vector<1x1xf32>
    %cst_11 = arith.constant dense<0.000000e+00> : vector<1xf32>
    %22 = vector.multi_reduction <add>, %19, %cst_11 [1] : vector<1x128xf32> to vector<1xf32>
    %23 = vector.shape_cast %22 : vector<1xf32> to vector<1x1xf32>
    %24 = arith.addf %21, %23 : vector<1x1xf32>
    %c0_12 = arith.constant 0 : index
    %c0_13 = arith.constant 0 : index
    %25 = vector.load %arg7[%c0_12, %c0_13] : memref<1x1xf32, #tpu.memory_space<vmem>>, vector<1x1xf32>
    tpu.vector_store %arg7[%c0_12, %c0_13], %24 {strides = array<i32>} : memref<1x1xf32, #tpu.memory_space<vmem>>, vector<1x1xf32>,
    %cst_14 = arith.constant dense<0.000000e+00> : vector<4x1xf32>
    %26 = tpu.matmul %4, %19, %cst_14 {dimension_numbers = #tpu.dot_dimension_numbers<[1], [1], [0], [0], [0, 0, 1, 0], [], []>} : vector<4x128xf32>, vector<1x128xf32>, vector<4x1xf32> -> vector<4x1xf32>
    %c0_15 = arith.constant 0 : index
    %c0_16 = arith.constant 0 : index
    %27 = vector.load %arg8[%c0_15, %c0_16] : memref<4x1xf32, #tpu.memory_space<vmem>>, vector<4x1xf32>
    %28 = vector.broadcast %16 : vector<1x1xf32> to vector<4x1xf32>
    %29 = arith.mulf %28, %27 : vector<4x1xf32>
    %30 = arith.addf %29, %26 : vector<4x1xf32>
    %c0_17 = arith.constant 0 : index
    %c0_18 = arith.constant 0 : index
    %31 = vector.load %arg8[%c0_17, %c0_18] : memref<4x1xf32, #tpu.memory_space<vmem>>, vector<4x1xf32>
    tpu.vector_store %arg8[%c0_17, %c0_18], %30 {strides = array<i32>} : memref<4x1xf32, #tpu.memory_space<vmem>>, vector<4x1xf32>,
    %c0_19 = arith.constant 0 : index
    %c0_20 = arith.constant 0 : index
    %32 = vector.load %arg9[%c0_19, %c0_20] : memref<1x1xf32, #tpu.memory_space<vmem>>, vector<1x1xf32>
    %33 = arith.mulf %16, %32 : vector<1x1xf32>
    %34 = arith.mulf %9, %19 : vector<1x128xf32>
    %cst_21 = arith.constant dense<0.000000e+00> : vector<1xf32>
    %35 = vector.multi_reduction <add>, %34, %cst_21 [1] : vector<1x128xf32> to vector<1xf32>
    %36 = vector.shape_cast %35 : vector<1xf32> to vector<1x1xf32>
    %37 = arith.addf %33, %36 : vector<1x1xf32>
    %c0_22 = arith.constant 0 : index
    %c0_23 = arith.constant 0 : index
    %38 = vector.load %arg9[%c0_22, %c0_23] : memref<1x1xf32, #tpu.memory_space<vmem>>, vector<1x1xf32>
    tpu.vector_store %arg9[%c0_22, %c0_23], %37 {strides = array<i32>} : memref<1x1xf32, #tpu.memory_space<vmem>>, vector<1x1xf32>,
    %c0_24 = arith.constant 0 : index
    %c0_25 = arith.constant 0 : index
    %39 = vector.load %arg6[%c0_24, %c0_25] : memref<1x1xf32, #tpu.memory_space<vmem>>, vector<1x1xf32>
    tpu.vector_store %arg6[%c0_24, %c0_25], %13 {strides = array<i32>} : memref<1x1xf32, #tpu.memory_space<vmem>>, vector<1x1xf32>,
    %c1_i32 = arith.constant 1 : i32
    %40 = arith.cmpi eq, %arg1, %c1_i32 : i32
    %41 = arith.extui %40 : i1 to i32
    %c0_i32_26 = arith.constant 0 : i32
    %42 = arith.cmpi ne, %41, %c0_i32_26 : i32
    scf.if %42 {
      %c0_27 = arith.constant 0 : index
      %c0_28 = arith.constant 0 : index
      %43 = vector.load %arg7[%c0_27, %c0_28] : memref<1x1xf32, #tpu.memory_space<vmem>>, vector<1x1xf32>
      %cst_29 = arith.constant 1.000000e+00 : f32
      %44 = vector.broadcast %cst_29 : f32 to vector<1x1xf32>
      %45 = arith.divf %44, %43 : vector<1x1xf32>
      %c0_30 = arith.constant 0 : index
      %c0_31 = arith.constant 0 : index
      %46 = vector.load %arg8[%c0_30, %c0_31] : memref<4x1xf32, #tpu.memory_space<vmem>>, vector<4x1xf32>
      %47 = vector.broadcast %45 : vector<1x1xf32> to vector<4x1xf32>
      %48 = arith.mulf %46, %47 : vector<4x1xf32>
      %c0_32 = arith.constant 0 : index
      %c0_33 = arith.constant 0 : index
      %c0_34 = arith.constant 0 : index
      %49 = vector.load %arg4[%c0_32, %c0_33, %c0_34] : memref<1x4x1xf32, #tpu.memory_space<vmem>>, vector<1x4x1xf32>
      %50 = vector.shape_cast %49 : vector<1x4x1xf32> to vector<4x1xf32>
      %51 = vector.shape_cast %48 : vector<4x1xf32> to vector<1x4x1xf32>
      tpu.vector_store %arg4[%c0_32, %c0_33, %c0_34], %51 {strides = array<i32>} : memref<1x4x1xf32, #tpu.memory_space<vmem>>, vector<1x4x1xf32>,
      %c0_35 = arith.constant 0 : index
      %c0_36 = arith.constant 0 : index
      %52 = vector.load %arg9[%c0_35, %c0_36] : memref<1x1xf32, #tpu.memory_space<vmem>>, vector<1x1xf32>
      %53 = arith.mulf %52, %45 : vector<1x1xf32>
      %c0_37 = arith.constant 0 : index
      %c0_38 = arith.constant 0 : index
      %c0_39 = arith.constant 0 : index
      %54 = vector.load %arg5[%c0_37, %c0_38, %c0_39] : memref<1x1x1xf32, #tpu.memory_space<vmem>>, vector<1x1x1xf32>
      %55 = vector.shape_cast %54 : vector<1x1x1xf32> to vector<1x1xf32>
      %56 = vector.shape_cast %53 : vector<1x1xf32> to vector<1x1x1xf32>
      tpu.vector_store %arg5[%c0_37, %c0_38, %c0_39], %56 {strides = array<i32>} : memref<1x1x1xf32, #tpu.memory_space<vmem>>, vector<1x1x1xf32>,
    } else {
    }
    return
  }
  func.func @transform_0(%arg0: i32, %arg1: i32) -> (i32, i32, i32) {
    %c0_i32 = arith.constant 0 : i32
    %c0_i32_0 = arith.constant 0 : i32
    return %arg0, %c0_i32, %arg1 : i32, i32, i32
  }
  func.func @transform_1(%arg0: i32, %arg1: i32) -> (i32, i32, i32) {
    %c0_i32 = arith.constant 0 : i32
    %c0_i32_0 = arith.constant 0 : i32
    %c0_i32_1 = arith.constant 0 : i32
    return %arg0, %c0_i32, %c0_i32_0 : i32, i32, i32
  }
  func.func @transform_2(%arg0: i32, %arg1: i32) -> (i32, i32, i32) {
    %c0_i32 = arith.constant 0 : i32
    %c0_i32_0 = arith.constant 0 : i32
    %c0_i32_1 = arith.constant 0 : i32
    return %arg0, %c0_i32, %c0_i32_0 : i32, i32, i32
  }
  func.func @transform_3(%arg0: i32, %arg1: i32) -> (i32, i32, i32) {
    %c0_i32 = arith.constant 0 : i32
    %c0_i32_0 = arith.constant 0 : i32
    %c0_i32_1 = arith.constant 0 : i32
    return %arg0, %c0_i32, %c0_i32_0 : i32, i32, i32
  }
}

</mosaic_0001>

<llo_original>
// kernel: tpu_custom_call.1
$region0: #{tpu_custom_call.1}
  #allocation0 [shape = 'u32[]', space=smem, size = 0x4, offset = 0x4, fixed_abs, tag = 'smem constant byte address 0x4 - core index']
  #allocation1 [shape = 'u32[72,128]{1,0:T(1,128)}', space=vmem, size = 0x9000, scoped, tag = 'internal scratch']
  #allocation2 [shape = 'f32[1,1]{1,0:T(1,128)}', space=vmem, size = 0x200, scoped, tag = 'scratch operand']
  #allocation3 [shape = 'f32[1,1]{1,0:T(1,128)}', space=vmem, size = 0x200, scoped, tag = 'scratch operand']
  #allocation4 [shape = 'f32[4,1]{1,0:T(4,128)}', space=vmem, size = 0x800, scoped, tag = 'scratch operand']
  #allocation5 [shape = 'f32[1,1]{1,0:T(1,128)}', space=vmem, size = 0x200, scoped, tag = 'scratch operand']
  %s0 = inlined_call_operand.hbm [shape: f32[2,4,256], index: 0, kind: input, shape index: {}]
  %s1 = inlined_call_operand.hbm [shape: f32[2,1,256], index: 1, kind: input, shape index: {}]
  %s2 = inlined_call_operand.vmem [shape: f32[2,4,1], index: 2, kind: output, shape index: {0}]
  %s3 = inlined_call_operand.vmem [shape: f32[2,1,1], index: 3, kind: output, shape index: {1}]
  %4 = xla_tuple %s2, %s3
  %s5 = sld [smem:[#allocation0]]
  $region65: #{tpu_custom_call.1} parent=0
    _
  %s7 = ssub.s32 1, %s5
  %s8 = scalar_select 0, %s7, %s5
  $region1: #{tpu_custom_call.1} parent=0
    #allocation6 [shape = 'u8[4096]{0}', space=vmem, size = 0x1000, scoped, tag = 'input window, operand 0']
    #allocation7 [shape = 's32[2]{0}', space=sflag, size = 0x8, scoped, tag = 'scoped memory for tpu_custom_call.1']
    #allocation8 [shape = 'u8[2048]{0}', space=vmem, size = 0x800, scoped, tag = 'input window, operand 1']
    #allocation9 [shape = 's32[2]{0}', space=sflag, size = 0x8, scoped, tag = 'scoped memory for tpu_custom_call.1']
    %9 = vsyncpa [#allocation7], 0
    %s10 = scalar_lea.sflag [#allocation7], 1
    %11 = vsyncpa %s10, 0
    %12 = vsyncpa [#allocation9], 0
    %s13 = scalar_lea.sflag [#allocation9], 1
    %14 = vsyncpa %s13, 0
    loop: start=0, step=1, limit=6
    $region2: #{tpu_custom_call.1} parent=1 // loop_pre_header
      _
    $region3: #{tpu_custom_call.1} parent=1 // loop_header
      %s16 = sphi 0, %s20
      %p17 = scmp.ge.s32.totalorder %s16, 6
      %s23 = sphi 0, %s35
      %s24 = sphi 0, %s31
      %s25 = sphi 0, %s23
      %s26 = sphi 0, %s24
      %s27 = sphi 0, %s25
      %s28 = sphi 0, %s26
      %s40 = sphi 0, %s42
      %s43 = sphi 0, %s40
      %s44 = sphi 0, %s43
      %s60 = sphi 0, %s44
      %s66 = sphi 0, %s68
      %s69 = sphi 0, %s66
      %s70 = sphi 0, %s69
      %s86 = sphi 0, %s70
      %s92 = sphi 0, %s94
      %s95 = sphi 0, %s92
      %s96 = sphi 0, %s95
      %s112 = sphi 0, %s96
      %s118 = sphi 0, %s120
      %s121 = sphi 0, %s118
      %s122 = sphi 0, %s121
      %s138 = sphi 0, %s122
    $region4: #{tpu_custom_call.1} parent=1 // loop_header_branch
      %19 = sbr.rel (%p17) target = $region8
    $region5: #{tpu_custom_call.1} parent=1 // loop_body
      %s21 = ssub.s32 %s16, 1
      %s22 = ssub.s32 %s16, 2
      %s29 = sadd.s32 1, %s24
      %p30 = scmp.ge.s32.totalorder %s29, 2
      %s31 = scalar_select %p30, 0, %s29
      %s32 = sadd.s32 1, %s23
      %s33 = scalar_select %p30, %s32, %s23
      %p34 = scmp.ge.s32.totalorder %s33, 2
      %s35 = scalar_select %p34, 0, %s33
      %s36 = ssub.s32 %s23, %s35
      %s37 = ssub.s32 %s24, %s31
      %s38 = sor.u32 %s36, %s37
      %p39 = scmp.eq.s32.totalorder %s38, 0
      %s41 = sadd.s32 %s40, 1
      %s42 = scalar_select %p39, %s40, %s41
      %p45 = pneg %p39
      %p46 = scmp.eq.s32.totalorder %s16, 3
      %p47 = por %p45, %p46
      %p48 = scmp.ne.s32.totalorder %s40, %s43
      %p49 = scmp.eq.s32.totalorder %s16, 0
      %p50 = por %p48, %p49
      %p51 = scmp.ne.s32.totalorder %s40, %s43
      %p52 = scmp.eq.s32.totalorder %s21, 3
      %p53 = por %p51, %p52
      %p54 = scmp.ne.s32.totalorder %s43, %s44
      %p55 = scmp.eq.s32.totalorder %s21, 0
      %p56 = por %p54, %p55
      %p57 = scmp.ne.s32.totalorder %s43, %s44
      %p58 = scmp.eq.s32.totalorder %s22, 3
      %p59 = por %p57, %p58
      %p61 = scmp.ne.s32.totalorder %s44, %s60
      %p62 = scmp.eq.s32.totalorder %s22, 0
      %p63 = por %p61, %p62
      %s64 = ssub.s32 %s23, %s35
      %p65 = scmp.eq.s32.totalorder %s64, 0
      %s67 = sadd.s32 %s66, 1
      %s68 = scalar_select %p65, %s66, %s67
      %p71 = pneg %p65
      %p72 = scmp.eq.s32.totalorder %s16, 3
      %p73 = por %p71, %p72
      %p74 = scmp.ne.s32.totalorder %s66, %s69
      %p75 = scmp.eq.s32.totalorder %s16, 0
      %p76 = por %p74, %p75
      %p77 = scmp.ne.s32.totalorder %s66, %s69
      %p78 = scmp.eq.s32.totalorder %s21, 3
      %p79 = por %p77, %p78
      %p80 = scmp.ne.s32.totalorder %s69, %s70
      %p81 = scmp.eq.s32.totalorder %s21, 0
      %p82 = por %p80, %p81
      %p83 = scmp.ne.s32.totalorder %s69, %s70
      %p84 = scmp.eq.s32.totalorder %s22, 3
      %p85 = por %p83, %p84
      %p87 = scmp.ne.s32.totalorder %s70, %s86
      %p88 = scmp.eq.s32.totalorder %s22, 0
      %p89 = por %p87, %p88
      %s90 = ssub.s32 %s23, %s35
      %p91 = scmp.eq.s32.totalorder %s90, 0
      %s93 = sadd.s32 %s92, 1
      %s94 = scalar_select %p91, %s92, %s93
      %p97 = pneg %p91
      %p98 = scmp.eq.s32.totalorder %s16, 3
      %p99 = por %p97, %p98
      %p100 = scmp.ne.s32.totalorder %s92, %s95
      %p101 = scmp.eq.s32.totalorder %s16, 0
      %p102 = por %p100, %p101
      %p103 = scmp.ne.s32.totalorder %s92, %s95
      %p104 = scmp.eq.s32.totalorder %s21, 3
      %p105 = por %p103, %p104
      %p106 = scmp.ne.s32.totalorder %s95, %s96
      %p107 = scmp.eq.s32.totalorder %s21, 0
      %p108 = por %p106, %p107
      %p109 = scmp.ne.s32.totalorder %s95, %s96
      %p110 = scmp.eq.s32.totalorder %s22, 3
      %p111 = por %p109, %p110
      %p113 = scmp.ne.s32.totalorder %s96, %s112
      %p114 = scmp.eq.s32.totalorder %s22, 0
      %p115 = por %p113, %p114
      %s116 = ssub.s32 %s23, %s35
      %p117 = scmp.eq.s32.totalorder %s116, 0
      %s119 = sadd.s32 %s118, 1
      %s120 = scalar_select %p117, %s118, %s119
      %p123 = pneg %p117
      %p124 = scmp.eq.s32.totalorder %s16, 3
      %p125 = por %p123, %p124
      %p126 = scmp.ne.s32.totalorder %s118, %s121
      %p127 = scmp.eq.s32.totalorder %s16, 0
      %p128 = por %p126, %p127
      %p129 = scmp.ne.s32.totalorder %s118, %s121
      %p130 = scmp.eq.s32.totalorder %s21, 3
      %p131 = por %p129, %p130
      %p132 = scmp.ne.s32.totalorder %s121, %s122
      %p133 = scmp.eq.s32.totalorder %s21, 0
      %p134 = por %p132, %p133
      %p135 = scmp.ne.s32.totalorder %s121, %s122
      %p136 = scmp.eq.s32.totalorder %s22, 3
      %p137 = por %p135, %p136
      %p139 = scmp.ne.s32.totalorder %s122, %s138
      %p140 = scmp.eq.s32.totalorder %s22, 0
      %p141 = por %p139, %p140
      %p142 = scmp.le.s32.totalorder 1, %s16
      %p143 = scmp.lt.s32.totalorder %s16, 5
      %p144 = pnand %p142, %p143
      %p145 = pneg %p144
      // Predicated region
      $region9: #{tpu_custom_call.1} parent=5 // pred_check
        _
      $region10: #{tpu_custom_call.1} parent=5 // pred_check_branch
        %147 = sbr.rel (%p144) target = $region12
      $region11: #{tpu_custom_call.1} parent=5 // pred_region
        %s148 = ssub.s32 %s16, 1
      $region12: #{tpu_custom_call.1} parent=5 // pred_fallthru
        _
      %p149 = scmp.lt.s32.totalorder %s16, 4
      // Predicated region
      $region13: #{tpu_custom_call.1} parent=5 // pred_check
        %p150 = pneg %p149
      $region14: #{tpu_custom_call.1} parent=5 // pred_check_branch
        %152 = sbr.rel (%p150) target = $region16
      $region15: #{tpu_custom_call.1} parent=5 // pred_region
        // Predicated region
        $region17: #{tpu_custom_call.1} parent=15 // pred_check
          %p153 = pneg %p50
        $region18: #{tpu_custom_call.1} parent=15 // pred_check_branch
          %155 = sbr.rel (%p153) target = $region20
        $region19: #{tpu_custom_call.1} parent=15 // pred_region
          %s156 = sand.u32 %s40, 1
          %s157 = scalar_lea.sflag [#allocation7], %s156
          %s158 = sand.u32 %s40, 1
          %s159 = smul.addr %s158, 4
          %s160 = scalar_lea.vmem [#allocation6], %s159
          %162 = vsyncadd %s157, 0
          %s163 = smul.addr %s23, 2
          %s164 = sadd.s32 %s24, %s163
          %s165 = smul.addr %s164, 4
          %s166 = scalar_lea.hbm %s0, %s165
          %s168 = sshll.u32 %s166, 4
          %s169 = int_to_ptr.hbm [resolvable:$true] %s168
          %s170 = sshll.u32 %s160, 4
          %s171 = int_to_ptr.vmem [resolvable:$true] %s170
          %173 = dma.hbm_to_vmem [thread:$0]  %s169, 64, %s171, %s157
        $region20: #{tpu_custom_call.1} parent=15 // pred_fallthru
          _
        // Predicated region
        $region21: #{tpu_custom_call.1} parent=15 // pred_check
          %p174 = pneg %p76
        $region22: #{tpu_custom_call.1} parent=15 // pred_check_branch
          %176 = sbr.rel (%p174) target = $region24
        $region23: #{tpu_custom_call.1} parent=15 // pred_region
          %s177 = sand.u32 %s66, 1
          %s178 = scalar_lea.sflag [#allocation9], %s177
          %s179 = sand.u32 %s66, 1
          %s180 = smul.addr %s179, 2
          %s181 = scalar_lea.vmem [#allocation8], %s180
          %183 = vsyncadd %s178, 0
          %s184 = smul.addr %s23, 2
          %s185 = scalar_lea.hbm %s1, %s184
          %s187 = sshll.u32 %s185, 4
          %s188 = int_to_ptr.hbm [resolvable:$true] %s187
          %s189 = sshll.u32 %s181, 4
          %s190 = int_to_ptr.vmem [resolvable:$true] %s189
          %192 = dma.hbm_to_vmem [thread:$0]  %s188, 32, %s190, %s178
        $region24: #{tpu_custom_call.1} parent=15 // pred_fallthru
          _
      $region16: #{tpu_custom_call.1} parent=5 // pred_fallthru
        _
      %p193 = scmp.le.s32.totalorder 1, %s16
      %p194 = scmp.lt.s32.totalorder %s16, 5
      %p195 = pnand %p193, %p194
      %p196 = pneg %p195
      // Predicated region
      $region25: #{tpu_custom_call.1} parent=5 // pred_check
        _
      $region26: #{tpu_custom_call.1} parent=5 // pred_check_branch
        %198 = sbr.rel (%p195) target = $region28
      $region27: #{tpu_custom_call.1} parent=5 // pred_region
        %s199 = ssub.s32 %s16, 1
        %s200 = sand.u32 %s43, 1
        %s201 = scalar_lea.sflag [#allocation7], %s200
        %s202 = sand.u32 %s43, 1
        %s203 = smul.addr %s202, 4
        %s204 = scalar_lea.vmem [#allocation6], %s203
        // Predicated region
        $region29: #{tpu_custom_call.1} parent=27 // pred_check
          %p205 = pneg %p56
        $region30: #{tpu_custom_call.1} parent=27 // pred_check_branch
          %207 = sbr.rel (%p205) target = $region32
        $region31: #{tpu_custom_call.1} parent=27 // pred_region
          %209 = dma.done %s201, 64
        $region32: #{tpu_custom_call.1} parent=27 // pred_fallthru
          _
        %s210 = sand.u32 %s69, 1
        %s211 = scalar_lea.sflag [#allocation9], %s210
        %s212 = sand.u32 %s69, 1
        %s213 = smul.addr %s212, 2
        %s214 = scalar_lea.vmem [#allocation8], %s213
        // Predicated region
        $region33: #{tpu_custom_call.1} parent=27 // pred_check
          %p215 = pneg %p82
        $region34: #{tpu_custom_call.1} parent=27 // pred_check_branch
          %217 = sbr.rel (%p215) target = $region36
        $region35: #{tpu_custom_call.1} parent=27 // pred_region
          %219 = dma.done %s211, 32
        $region36: #{tpu_custom_call.1} parent=27 // pred_fallthru
          _
        %s220 = sand.u32 %s43, 1
        %s221 = scalar_lea.sflag [#allocation7], %s220
        %s222 = sand.u32 %s43, 1
        %s223 = smul.addr %s222, 4
        %s224 = scalar_lea.vmem [#allocation6], %s223
        %p225 = pneg %p56
        %p226 = pneg %p53
        %s227 = sand.u32 %s69, 1
        %s228 = scalar_lea.sflag [#allocation9], %s227
        %s229 = sand.u32 %s69, 1
        %s230 = smul.addr %s229, 2
        %s231 = scalar_lea.vmem [#allocation8], %s230
        %p232 = pneg %p82
        %p233 = pneg %p79
        %p234 = pneg %p108
        %p235 = pneg %p105
        %p236 = scmp.lt.s32.totalorder %s25, 1
        %s237 = scalar_select %p236, %s25, 1
        %s238 = smul.addr %s237, 4
        %s239 = scalar_lea.vmem %s2, %s238
        %p240 = pneg %p134
        %p241 = pneg %p131
        %p242 = scmp.lt.s32.totalorder %s25, 1
        %s243 = scalar_select %p242, %s25, 1
        %s244 = scalar_lea.vmem %s3, %s243
        %p245 = scmp.lt.s32.totalorder %s25, 1
        %s246 = scalar_select %p245, %s25, 1
        %s247 = smul.addr %s246, 4
        %s248 = scalar_lea.vmem %s2, %s247
        %p249 = scmp.lt.s32.totalorder %s25, 1
        %s250 = scalar_select %p249, %s25, 1
        %s251 = scalar_lea.vmem %s3, %s250
        %p252 = scmp.eq.s32.totalorder %s26, 0
        // Predicated region
        $region37: #{tpu_custom_call.1} parent=27 // pred_check
          %p253 = pneg %p252
        $region38: #{tpu_custom_call.1} parent=27 // pred_check_branch
          %255 = sbr.rel (%p253) target = $region40
        $region39: #{tpu_custom_call.1} parent=27 // pred_region
          %vm256 = vcmask 0
          %257 = vst.msk [vmem:[#allocation2] sm:$0x1] %vm256, -inf
          %258 = vst.msk [vmem:[#allocation3] sm:$0x1] %vm256, 0.0
          %vm259 = vcmask 3072
          %260 = vst.msk [vmem:[#allocation4] sm:$0xf] %vm259, 0.0
          %261 = vst.msk [vmem:[#allocation5] sm:$0x1] %vm256, 0.0
        $region40: #{tpu_custom_call.1} parent=27 // pred_fallthru
          _
        %v262 = vld [vmem:[%s204] sm:$0xf]
        %s263 = smul.u32 %s26, 128
        %s264 = sshra.s32 %s263, 7
        %s265 = sand.u32 %s263, 127
        %s266 = scalar_lea.vmem %s214, %s264 [#allocation8]
        %v267 = vld [vmem:[%s266] sm:$0x1]
        %vm268 = vcmask 1040384
        %v269 = vsel %vm268, %v267, -inf
        %270 = vmax.xlane.f32.xlu0 %v269
        %v271 = vpop.xlane.xlu0 %270
        %v272 = vld [vmem:[#allocation2] sm:$0x1]
        %v273 = vmax.f32 %v272, %v271
        %v274 = vsub.f32 %v272, %v273
        %v275 = vmul.f32 %v274, 1.442695
        %v276 = vpow.pop %v275
        %278 = vset.pattern.permute.xlu0 0
        %279 = vperm.xlu0 %278, %v273
        %v280 = vpop.permute.xlu0 %279
        %v282 = vperm.slane %v280, 0
        %v283 = vsub.f32 %v267, %v282
        %v284 = vmul.f32 %v283, 1.442695
        %v285 = vpow.pop %v284
        %v286 = vld [vmem:[#allocation3] sm:$0x1]
        %v287 = vmul.f32 %v276, %v286
        %v288 = vsel %vm268, %v285, 0.0
        %289 = vadd.xlane.f32.xlu0 %v288
        %v290 = vpop.xlane.xlu0 %289
        %v291 = vadd.f32 %v287, %v290
        %vm292 = vcmask 0
        %293 = vst.msk [vmem:[#allocation3] sm:$0x1] %vm292, %v291
        %v295 = vperm.slane %v285, 0
        %v297 = vmul.f32 %v262, %v295
        %vm298 = vcmask 1043456
        %v299 = vsel %vm298, %v297, 0.0
        %300 = vadd.xlane.f32.xlu0 %v299
        %v301 = vpop.xlane.xlu0 %300
        %v302 = vld [vmem:[#allocation4] sm:$0xf]
        %v304 = vperm.slane %v276, 0
        %v306 = vmul.f32 %v304, %v302
        %v307 = vadd.f32 %v306, %v301
        %vm308 = vcmask 3072
        %309 = vst.msk [vmem:[#allocation4] sm:$0xf] %vm308, %v307
        %v310 = vld [vmem:[#allocation5] sm:$0x1]
        %v311 = vmul.f32 %v276, %v310
        %v312 = vmul.f32 %v267, %v285
        %v313 = vsel %vm268, %v312, 0.0
        %314 = vadd.xlane.f32.xlu0 %v313
        %v315 = vpop.xlane.xlu0 %314
        %v316 = vadd.f32 %v311, %v315
        %317 = vst.msk [vmem:[#allocation5] sm:$0x1] %vm292, %v316
        %318 = vst.msk [vmem:[#allocation2] sm:$0x1] %vm292, %v273
        %p319 = scmp.eq.s32.totalorder %s26, 1
        // Predicated region
        $region41: #{tpu_custom_call.1} parent=27 // pred_check
          %p320 = pneg %p319
        $region42: #{tpu_custom_call.1} parent=27 // pred_check_branch
          %322 = sbr.rel (%p320) target = $region44
        $region43: #{tpu_custom_call.1} parent=27 // pred_region
          %v323 = vld [vmem:[#allocation3] sm:$0x1]
          %v324 = vrcp.pop %v323
          %v325 = vmul.f32 %v323, %v324
          %v326 = vsub.f32 1.0, %v325
          %v327 = vmul.f32 %v324, %v326
          %v328 = vadd.f32 %v324, %v327
          %vm329 = vweird.f32 %v323
          %vm330 = vweird.f32 %v324
          %vm331 = vmor %vm329, %vm330
          %v332 = vsel %vm331, %v324, %v328
          %v333 = vand.u32 2147483647, %v323
          %vm334 = vcmp.eq.f32.partialorder %v333, 8.507059e+37
          %v335 = vand.u32 %v323, 2147483648
          %v336 = vor.u32 1.1754944e-38, %v335
          %v337 = vsel %vm334, %v336, %v332
          %v338 = vmul.f32 1.0, %v337
          %v339 = vld [vmem:[#allocation4] sm:$0xf]
          %v341 = vperm.slane %v338, 0
          %v343 = vmul.f32 %v339, %v341
          %344 = vst.msk [vmem:[%s248] sm:$0xf] %vm308, %v343
          %v345 = vld [vmem:[#allocation5] sm:$0x1]
          %v346 = vmul.f32 %v345, %v338
          %347 = vst.msk [vmem:[%s251] sm:$0x1] %vm292, %v346
        $region44: #{tpu_custom_call.1} parent=27 // pred_fallthru
          _
        %p348 = scmp.lt.s32.totalorder %s25, 1
        %s349 = scalar_select %p348, %s25, 1
        %s350 = smul.addr %s349, 4
        %s351 = scalar_lea.vmem %s2, %s350
        %p352 = scmp.lt.s32.totalorder %s25, 1
        %s353 = scalar_select %p352, %s25, 1
        %s354 = scalar_lea.vmem %s3, %s353
        // Predicated region
        $region45: #{tpu_custom_call.1} parent=27 // pred_check
          %p355 = pneg %p105
        $region46: #{tpu_custom_call.1} parent=27 // pred_check_branch
          %357 = sbr.rel (%p355) target = $region48
        $region47: #{tpu_custom_call.1} parent=27 // pred_region
          _
        $region48: #{tpu_custom_call.1} parent=27 // pred_fallthru
          _
        // Predicated region
        $region49: #{tpu_custom_call.1} parent=27 // pred_check
          %p358 = pneg %p131
        $region50: #{tpu_custom_call.1} parent=27 // pred_check_branch
          %360 = sbr.rel (%p358) target = $region52
        $region51: #{tpu_custom_call.1} parent=27 // pred_region
          _
        $region52: #{tpu_custom_call.1} parent=27 // pred_fallthru
          _
      $region28: #{tpu_custom_call.1} parent=5 // pred_fallthru
        _
      %p361 = scmp.le.s32.totalorder 2, %s16
      // Predicated region
      $region53: #{tpu_custom_call.1} parent=5 // pred_check
        %p362 = pneg %p361
      $region54: #{tpu_custom_call.1} parent=5 // pred_check_branch
        %364 = sbr.rel (%p362) target = $region56
      $region55: #{tpu_custom_call.1} parent=5 // pred_region
        %s365 = ssub.s32 %s16, 2
        // Predicated region
        $region57: #{tpu_custom_call.1} parent=55 // pred_check
          %p366 = pneg %p111
        $region58: #{tpu_custom_call.1} parent=55 // pred_check_branch
          %368 = sbr.rel (%p366) target = $region60
        $region59: #{tpu_custom_call.1} parent=55 // pred_region
          %p369 = scmp.lt.s32.totalorder %s27, 1
          %s370 = scalar_select %p369, %s27, 1
          %s371 = smul.addr %s370, 4
          %s372 = scalar_lea.vmem %s2, %s371
        $region60: #{tpu_custom_call.1} parent=55 // pred_fallthru
          _
        // Predicated region
        $region61: #{tpu_custom_call.1} parent=55 // pred_check
          %p373 = pneg %p137
        $region62: #{tpu_custom_call.1} parent=55 // pred_check_branch
          %375 = sbr.rel (%p373) target = $region64
        $region63: #{tpu_custom_call.1} parent=55 // pred_region
          %p376 = scmp.lt.s32.totalorder %s27, 1
          %s377 = scalar_select %p376, %s27, 1
          %s378 = scalar_lea.vmem %s3, %s377
        $region64: #{tpu_custom_call.1} parent=55 // pred_fallthru
          _
      $region56: #{tpu_custom_call.1} parent=5 // pred_fallthru
        _
    $region6: #{tpu_custom_call.1} parent=1 // loop_footer
      %s20 = sadd.s32 1, %s16
    $region7: #{tpu_custom_call.1} parent=1 // loop_footer_branch
      %15 = sbr.rel target = $region3
    $region8: #{tpu_custom_call.1} parent=1 // loop_exit
      _
    %379 = vsyncpa [#allocation7], 1
    %s380 = scalar_lea.sflag [#allocation7], 1
    %381 = vsyncpa %s380, 1
    %382 = vsyncpa [#allocation9], 1
    %s383 = scalar_lea.sflag [#allocation9], 1
    %384 = vsyncpa %s383, 1

</llo_original>
